<compile_context>
chip_gen: v5e
topology: v5e:2x2
jax: 0.10.0
libtpu: 0.0.40
codegen_flags: <defaults>
</compile_context>

<pallas_src>
import functools

import jax
import jax.numpy as jnp
from jax import lax
from jax.experimental import pallas as pl
from jax.experimental.pallas import tpu as pltpu

BN_EPS = 1e-5
LANE = 128
SUBLANE = 8


def _round_up(a, b):
    return (a + b - 1) // b * b


def _conv_pool_elu_stats_kernel(patches_ref, wmat_ref, bias_ref,
                                act_ref, stats_ref, *, m_real):
    """Conv matmul -> maxpool(3,1) -> bias -> ELU -> partial BN statistics."""
    pool = patches_ref.shape[0]
    tm = act_ref.shape[0]
    w = wmat_ref[...]

    # Conv as `pool` MXU matmuls; MaxPool2d((3,1)) = elementwise max of the
    # `pool` conv rows feeding each pooled output row (pool first -> 3x less
    # elementwise work downstream).
    p = jnp.dot(patches_ref[0], w, preferred_element_type=jnp.float32)
    for k in range(1, pool):
        p = jnp.maximum(p, jnp.dot(patches_ref[k], w,
                                   preferred_element_type=jnp.float32))

    # bias + ELU(alpha=1)
    p = p + bias_ref[...]
    act = jnp.where(p > 0.0, p, jnp.exp(jnp.minimum(p, 0.0)) - 1.0)
    act_ref[...] = act

    # Per-tile partial BatchNorm stats; rows >= m_real are zero-padding rows and
    # must not contribute to the batch statistics.
    row = pl.program_id(0) * tm + lax.broadcasted_iota(jnp.int32, (tm, 1), 0)
    valid = (row < m_real).astype(jnp.float32)
    av = act * valid
    s1 = jnp.sum(av, axis=0, keepdims=True)
    s2 = jnp.sum(av * av, axis=0, keepdims=True)
    stats_ref[...] = jnp.concatenate([s1, s2], axis=0)[None, :, :]


def _bn_dropout_kernel(act_ref, scale_ref, shift_ref, mask_ref, out_ref):
    """out = (act * scale + shift) * mask; scale/shift fold BN and 1/(1-p)."""
    out_ref[...] = ((act_ref[...] * scale_ref[...] + shift_ref[...])
                    * mask_ref[...].astype(jnp.float32))


def conv_block_forward(x, w_conv, b_conv, gamma, beta, drop_p, key,
                       kernel_size=(3, 3), pool=3, block_m=512):
    """Training-mode forward of conv_block. Returns (N, Cout, Hp, Wo) float32."""
    N, Cin, H, W = x.shape
    Cout = w_conv.shape[0]
    KH, KW = kernel_size
    Ho, Wo = H - KH + 1, W - KW + 1        # Conv2d, padding=0, stride=1
    Hp = Ho // pool                        # MaxPool2d((3,1)), floor
    Hc = Hp * pool                         # conv rows that survive the pool
    K = Cin * KH * KW
    M = N * Hp * Wo                        # pooled output rows

    Cpad = _round_up(Cout, LANE)           # lane-dense channels
    Kpad = _round_up(K, LANE)              # lane-dense contraction dim
    TM = _round_up(min(block_m, M), SUBLANE)
    Mpad = _round_up(M, TM)
    n_tiles = Mpad // TM
    # VMEM per grid step (double-buffered): ~2*(pool*TM*Kpad*2 + TM*Cpad*4) B;
    # block_m=512 keeps this well under v7x's 32 MiB scoped VMEM.

    # ---- im2col glue (plain JAX, bf16). Rows ordered (pool_k, n, j, w); cols
    # ordered (cin, kh, kw) to match w_conv.reshape(Cout, K).
    # TODO(synk): build patches in-kernel from an x tile (implicit GEMM) to
    # remove this host-side HBM blow-up; kept as glue here for robustness.
    xb = x.astype(jnp.bfloat16)
    cols = []
    for kh in range(KH):
        for kw in range(KW):
            cols.append(xb[:, :, kh:kh + Hc, kw:kw + Wo])      # (N, Cin, Hc, Wo)
    pat = jnp.stack(cols, axis=2)                              # (N, Cin, KH*KW, Hc, Wo)
    pat = pat.reshape(N, Cin, KH * KW, Hp, pool, Wo)
    pat = pat.transpose(4, 0, 3, 5, 1, 2)                      # (pool, N, Hp, Wo, Cin, KK)
    patches = pat.reshape(pool, M, K)
    patches = jnp.pad(patches, ((0, 0), (0, Mpad - M), (0, Kpad - K)))

    wmat = w_conv.reshape(Cout, K).T.astype(jnp.bfloat16)      # (K, Cout)
    wmat = jnp.pad(wmat, ((0, Kpad - K), (0, Cpad - Cout)))
    bias2 = jnp.pad(b_conv.astype(jnp.float32), (0, Cpad - Cout)).reshape(1, Cpad)

    kernel1 = functools.partial(_conv_pool_elu_stats_kernel, m_real=M)
    act, stats = pl.pallas_call(
        kernel1,
        grid=(n_tiles,),
        in_specs=[
            pl.BlockSpec((pool, TM, Kpad), lambda i: (0, i, 0)),   # patches tile
            pl.BlockSpec((Kpad, Cpad), lambda i: (0, 0)),          # weights
            pl.BlockSpec((1, Cpad), lambda i: (0, 0)),             # bias
        ],
        out_specs=(
            pl.BlockSpec((TM, Cpad), lambda i: (i, 0)),            # activations
            pl.BlockSpec((1, 2, Cpad), lambda i: (i, 0, 0)),       # partial stats
        ),
        out_shape=(
            jax.ShapeDtypeStruct((Mpad, Cpad), jnp.float32),
            jax.ShapeDtypeStruct((n_tiles, 2, Cpad), jnp.float32),
        ),
        compiler_params=pltpu.CompilerParams(
            dimension_semantics=("parallel",)),
    )(patches, wmat, bias2)

    # ---- finalize BatchNorm stats (tiny per-channel glue) ----
    sums = jnp.sum(stats, axis=0)                       # (2, Cpad)
    mean = sums[0] / M
    var = jnp.maximum(sums[1] / M - mean * mean, 0.0)   # biased variance (training)
    gamma_p = jnp.pad(gamma.astype(jnp.float32), (0, Cpad - Cout))
    beta_p = jnp.pad(beta.astype(jnp.float32), (0, Cpad - Cout))
    inv = gamma_p * lax.rsqrt(var + BN_EPS)
    keep_scale = 1.0 / (1.0 - drop_p) if drop_p > 0.0 else 1.0
    scale = (inv * keep_scale).reshape(1, Cpad).astype(jnp.float32)
    shift = ((beta_p - mean * inv) * keep_scale).reshape(1, Cpad).astype(jnp.float32)
    # TODO(synk): running_mean / running_var buffer updates (PyTorch training-mode
    # side effect) are not produced; only the forward value is returned.

    # Dropout keep-mask from jax.random (pltpu.prng_* has no interpret lowering).
    mask = (jax.random.uniform(key, (Mpad, Cpad)) >= drop_p).astype(jnp.bfloat16)

    out2d = pl.pallas_call(
        _bn_dropout_kernel,
        grid=(n_tiles,),
        in_specs=[
            pl.BlockSpec((TM, Cpad), lambda i: (i, 0)),            # activations
            pl.BlockSpec((1, Cpad), lambda i: (0, 0)),             # folded scale
            pl.BlockSpec((1, Cpad), lambda i: (0, 0)),             # folded shift
            pl.BlockSpec((TM, Cpad), lambda i: (i, 0)),            # dropout mask
        ],
        out_specs=pl.BlockSpec((TM, Cpad), lambda i: (i, 0)),
        out_shape=jax.ShapeDtypeStruct((Mpad, Cpad), jnp.float32),
        compiler_params=pltpu.CompilerParams(
            dimension_semantics=("parallel",)),
    )(act, scale, shift, mask)

    # rows are (n, j, w) -> NCHW (N, Cout, Hp, Wo)
    return out2d[:M, :Cout].reshape(N, Hp, Wo, Cout).transpose(0, 3, 1, 2)


def _reference_pre_dropout(x, w_conv, b_conv, gamma, beta, pool=3):
    """Plain-JAX conv->ELU->maxpool->BN (no dropout), bf16 conv like the kernel."""
    conv = lax.conv_general_dilated(
        x.astype(jnp.bfloat16), w_conv.astype(jnp.bfloat16), (1, 1), 'VALID',
        dimension_numbers=('NCHW', 'OIHW', 'NCHW'),
        preferred_element_type=jnp.float32)
    conv = conv + b_conv[None, :, None, None]
    elu = jnp.where(conv > 0, conv, jnp.exp(jnp.minimum(conv, 0.0)) - 1.0)
    N, Cout, Ho, Wo = elu.shape
    Hp = Ho // pool
    p = elu[:, :, :Hp * pool].reshape(N, Cout, Hp, pool, Wo).max(axis=3)
    mean = p.mean(axis=(0, 2, 3), keepdims=True)
    var = ((p - mean) ** 2).mean(axis=(0, 2, 3), keepdims=True)
    return ((p - mean) / jnp.sqrt(var + BN_EPS) * gamma[None, :, None, None]
            + beta[None, :, None, None])


if __name__ == "__main__":
    N, Cin, H, W = 2, 4, 16, 16
    Cout, KH, KW = 8, 3, 3
    drop_p = 0.25

    key = jax.random.PRNGKey(0)
    k1, k2, k3, k4, k5, k6 = jax.random.split(key, 6)
    fan_in = Cin * KH * KW
    bound = 1.0 / (fan_in ** 0.5)
    w_conv = jax.random.uniform(k1, (Cout, Cin, KH, KW), jnp.float32, -bound, bound)
    b_conv = jax.random.uniform(k2, (Cout,), jnp.float32, -bound, bound)
    gamma = 1.0 + 0.1 * jax.random.normal(k4, (Cout,), jnp.float32)
    beta = 0.1 * jax.random.normal(k5, (Cout,), jnp.float32)
    x = jax.random.normal(k3, (N, Cin, H, W), jnp.float32)

    # block_m=64 forces a 2-tile grid (M = 112) to exercise the tiled/masked path.
    out_nodrop = conv_block_forward(x, w_conv, b_conv, gamma, beta, 0.0, k6,
                                    block_m=64)
    out = conv_block_forward(x, w_conv, b_conv, gamma, beta, drop_p, k6,
                             block_m=64)
    out_nodrop, out = jax.block_until_ready((out_nodrop, out))

    Hp, Wo = (H - KH + 1) // 3, W - KW + 1
    assert out.shape == (N, Cout, Hp, Wo), out.shape

    ref_bn = _reference_pre_dropout(x, w_conv, b_conv, gamma, beta)
    # No-dropout path must match the reference directly.
    assert jnp.allclose(out_nodrop, ref_bn, atol=2e-3, rtol=2e-3), (
        float(jnp.max(jnp.abs(out_nodrop - ref_bn))))
    # With dropout: kept elements equal reference / (1-p); dropped are exactly 0.
    scaled = ref_bn / (1.0 - drop_p)
    ok = jnp.all(jnp.isclose(out, 0.0, atol=1e-6)
                 | jnp.isclose(out, scaled, atol=2e-3, rtol=2e-3))
    assert bool(ok), "Pallas kernel output mismatch vs reference"

    print("KERNEL_OK")
</pallas_src>

<mosaic_0001>
module attributes {stable_mosaic.version = 11 : i64} {
  func.func @_conv_pool_elu_stats_kernel(%arg0: i32, %arg1: memref<3x64x128xbf16, #tpu.memory_space<vmem>>, %arg2: memref<128x128xbf16, #tpu.memory_space<vmem>>, %arg3: memref<1x128xf32, #tpu.memory_space<vmem>>, %arg4: memref<64x128xf32, #tpu.memory_space<vmem>>, %arg5: memref<1x2x128xf32, #tpu.memory_space<vmem>>) attributes {dimension_semantics = [#tpu.dimension_semantics<parallel>], iteration_bounds = array<i64: 2>, scalar_prefetch = 0 : i64, scratch_operands = 0 : i64, tpu.core_type = #tpu.core_type<tc>, window_params = [{transform_indices = @transform_0, window_bounds = array<i64: 3, 64, 128>}, {pipeline_mode = #tpu.pipeline_mode<synchronous>, transform_indices = @transform_1, window_bounds = array<i64: 128, 128>}, {pipeline_mode = #tpu.pipeline_mode<synchronous>, transform_indices = @transform_2, window_bounds = array<i64: 1, 128>}, {transform_indices = @transform_3, window_bounds = array<i64: 64, 128>}, {transform_indices = @transform_4, window_bounds = array<i64: 1, 2, 128>}]} {
    %c0 = arith.constant 0 : index
    %c0_0 = arith.constant 0 : index
    %0 = vector.load %arg2[%c0, %c0_0] : memref<128x128xbf16, #tpu.memory_space<vmem>>, vector<128x128xbf16>
    %c0_1 = arith.constant 0 : index
    %c0_2 = arith.constant 0 : index
    %c0_3 = arith.constant 0 : index
    %1 = vector.load %arg1[%c0_1, %c0_2, %c0_3] : memref<3x64x128xbf16, #tpu.memory_space<vmem>>, vector<1x64x128xbf16>
    %2 = vector.shape_cast %1 : vector<1x64x128xbf16> to vector<64x128xbf16>
    %cst = arith.constant dense<0.000000e+00> : vector<64x128xf32>
    %3 = tpu.matmul %2, %0, %cst {dimension_numbers = #tpu.dot_dimension_numbers<[1], [0], [0], [1], [0, 0, 1, 1], [], []>} : vector<64x128xbf16>, vector<128x128xbf16>, vector<64x128xf32> -> vector<64x128xf32>
    %c1 = arith.constant 1 : index
    %c0_4 = arith.constant 0 : index
    %c0_5 = arith.constant 0 : index
    %4 = vector.load %arg1[%c1, %c0_4, %c0_5] : memref<3x64x128xbf16, #tpu.memory_space<vmem>>, vector<1x64x128xbf16>
    %5 = vector.shape_cast %4 : vector<1x64x128xbf16> to vector<64x128xbf16>
    %cst_6 = arith.constant dense<0.000000e+00> : vector<64x128xf32>
    %6 = tpu.matmul %5, %0, %cst_6 {dimension_numbers = #tpu.dot_dimension_numbers<[1], [0], [0], [1], [0, 0, 1, 1], [], []>} : vector<64x128xbf16>, vector<128x128xbf16>, vector<64x128xf32> -> vector<64x128xf32>
    %7 = arith.maximumf %3, %6 : vector<64x128xf32>
    %c2 = arith.constant 2 : index
    %c0_7 = arith.constant 0 : index
    %c0_8 = arith.constant 0 : index
    %8 = vector.load %arg1[%c2, %c0_7, %c0_8] : memref<3x64x128xbf16, #tpu.memory_space<vmem>>, vector<1x64x128xbf16>
    %9 = vector.shape_cast %8 : vector<1x64x128xbf16> to vector<64x128xbf16>
    %cst_9 = arith.constant dense<0.000000e+00> : vector<64x128xf32>
    %10 = tpu.matmul %9, %0, %cst_9 {dimension_numbers = #tpu.dot_dimension_numbers<[1], [0], [0], [1], [0, 0, 1, 1], [], []>} : vector<64x128xbf16>, vector<128x128xbf16>, vector<64x128xf32> -> vector<64x128xf32>
    %11 = arith.maximumf %7, %10 : vector<64x128xf32>
    %c0_10 = arith.constant 0 : index
    %c0_11 = arith.constant 0 : index
    %12 = vector.load %arg3[%c0_10, %c0_11] : memref<1x128xf32, #tpu.memory_space<vmem>>, vector<1x128xf32>
    %13 = vector.broadcast %12 : vector<1x128xf32> to vector<64x128xf32>
    %14 = arith.addf %11, %13 : vector<64x128xf32>
    %cst_12 = arith.constant 0.000000e+00 : f32
    %15 = vector.broadcast %cst_12 : f32 to vector<64x128xf32>
    %16 = arith.cmpf ogt, %14, %15 : vector<64x128xf32>
    %cst_13 = arith.constant 0.000000e+00 : f32
    %17 = vector.broadcast %cst_13 : f32 to vector<64x128xf32>
    %18 = arith.minimumf %14, %17 : vector<64x128xf32>
    %19 = math.exp %18 : vector<64x128xf32>
    %cst_14 = arith.constant 1.000000e+00 : f32
    %20 = vector.broadcast %cst_14 : f32 to vector<64x128xf32>
    %21 = arith.subf %19, %20 : vector<64x128xf32>
    %22 = arith.select %16, %14, %21 : vector<64x128xi1>, vector<64x128xf32>
    %c0_15 = arith.constant 0 : index
    %c0_16 = arith.constant 0 : index
    %23 = vector.load %arg4[%c0_15, %c0_16] : memref<64x128xf32, #tpu.memory_space<vmem>>, vector<64x128xf32>
    tpu.vector_store %arg4[%c0_15, %c0_16], %22 {strides = array<i32>} : memref<64x128xf32, #tpu.memory_space<vmem>>, vector<64x128xf32>,
    %c64_i32 = arith.constant 64 : i32
    %24 = arith.muli %arg0, %c64_i32 : i32
    %25 = tpu.iota {dimensions = array<i32: 0>} : vector<64x1xi32>
    %26 = vector.broadcast %24 : i32 to vector<64x1xi32>
    %27 = arith.addi %26, %25 : vector<64x1xi32>
    %c112_i32 = arith.constant 112 : i32
    %28 = vector.broadcast %c112_i32 : i32 to vector<64x1xi32>
    %29 = arith.cmpi slt, %27, %28 : vector<64x1xi32>
    %30 = arith.extui %29 : vector<64x1xi1> to vector<64x1xi32>
    %31 = arith.sitofp %30 : vector<64x1xi32> to vector<64x1xf32>
    %32 = vector.broadcast %31 : vector<64x1xf32> to vector<64x128xf32>
    %33 = arith.mulf %22, %32 : vector<64x128xf32>
    %cst_17 = arith.constant dense<0.000000e+00> : vector<128xf32>
    %34 = vector.multi_reduction <add>, %33, %cst_17 [0] : vector<64x128xf32> to vector<128xf32>
    %35 = vector.shape_cast %34 : vector<128xf32> to vector<1x128xf32>
    %36 = arith.mulf %33, %33 : vector<64x128xf32>
    %cst_18 = arith.constant dense<0.000000e+00> : vector<128xf32>
    %37 = vector.multi_reduction <add>, %36, %cst_18 [0] : vector<64x128xf32> to vector<128xf32>
    %38 = vector.shape_cast %37 : vector<128xf32> to vector<1x128xf32>
    %39 = tpu.concatenate %35, %38 in 0 : vector<1x128xf32>, vector<1x128xf32> -> vector<2x128xf32>
    %40 = vector.shape_cast %39 : vector<2x128xf32> to vector<1x2x128xf32>
    %c0_19 = arith.constant 0 : index
    %c0_20 = arith.constant 0 : index
    %c0_21 = arith.constant 0 : index
    %41 = vector.load %arg5[%c0_19, %c0_20, %c0_21] : memref<1x2x128xf32, #tpu.memory_space<vmem>>, vector<1x2x128xf32>
    tpu.vector_store %arg5[%c0_19, %c0_20, %c0_21], %40 {strides = array<i32>} : memref<1x2x128xf32, #tpu.memory_space<vmem>>, vector<1x2x128xf32>,
    return
  }
  func.func @transform_0(%arg0: i32) -> (i32, i32, i32) {
    %c0_i32 = arith.constant 0 : i32
    %c0_i32_0 = arith.constant 0 : i32
    %c0_i32_1 = arith.constant 0 : i32
    return %c0_i32, %arg0, %c0_i32_0 : i32, i32, i32
  }
  func.func @transform_1(%arg0: i32) -> (i32, i32) {
    %c0_i32 = arith.constant 0 : i32
    %c0_i32_0 = arith.constant 0 : i32
    %c0_i32_1 = arith.constant 0 : i32
    return %c0_i32, %c0_i32_0 : i32, i32
  }
  func.func @transform_2(%arg0: i32) -> (i32, i32) {
    %c0_i32 = arith.constant 0 : i32
    %c0_i32_0 = arith.constant 0 : i32
    %c0_i32_1 = arith.constant 0 : i32
    return %c0_i32, %c0_i32_0 : i32, i32
  }
  func.func @transform_3(%arg0: i32) -> (i32, i32) {
    %c0_i32 = arith.constant 0 : i32
    %c0_i32_0 = arith.constant 0 : i32
    return %arg0, %c0_i32 : i32, i32
  }
  func.func @transform_4(%arg0: i32) -> (i32, i32, i32) {
    %c0_i32 = arith.constant 0 : i32
    %c0_i32_0 = arith.constant 0 : i32
    %c0_i32_1 = arith.constant 0 : i32
    return %arg0, %c0_i32, %c0_i32_0 : i32, i32, i32
  }
}

</mosaic_0001>

<llo_original>
// kernel: tpu_custom_call.1
$region0: #{tpu_custom_call.1}
  #allocation0 [shape = 'u32[]', space=smem, size = 0x4, offset = 0x4, fixed_abs, tag = 'smem constant byte address 0x4 - core index']
  #allocation1 [shape = 'u32[72,128]{1,0:T(1,128)}', space=vmem, size = 0x9000, scoped, tag = 'internal scratch']
  #allocation10 [shape = 's32[]', space=sflag, size = 0x4, offset = 0, fixed_abs, tag = 'sflag constant byte address 0x0 - dummy sync flag']
  %s0 = inlined_call_operand.hbm [shape: bf16[3,128,128], index: 0, kind: input, shape index: {}]
  %s1 = inlined_call_operand.hbm [shape: bf16[128,128], index: 1, kind: input, shape index: {}]
  %s2 = inlined_call_operand.vmem [shape: f32[1,128], index: 2, kind: input, shape index: {}]
  %s3 = inlined_call_operand.hbm [shape: f32[128,128], index: 3, kind: output, shape index: {0}]
  %s4 = inlined_call_operand.hbm [shape: f32[2,2,128], index: 4, kind: output, shape index: {1}]
  %5 = xla_tuple %s3, %s4
  %s6 = sld [smem:[#allocation0]]
  $region61: #{tpu_custom_call.1} parent=0
    _
  %s8 = ssub.s32 1, %s6
  %s9 = scalar_select 0, %s8, %s6
  $region1: #{tpu_custom_call.1} parent=0
    #allocation2 [shape = 'u8[98304]{0}', space=vmem, size = 0x18000, scoped, tag = 'input window, operand 0']
    #allocation3 [shape = 's32[2]{0}', space=sflag, size = 0x8, scoped, tag = 'scoped memory for tpu_custom_call.1']
    #allocation4 [shape = 's32[2]{0}', space=sflag, size = 0x8, scoped, tag = 'scoped memory for tpu_custom_call.1']
    #allocation5 [shape = 'u8[32768]{0}', space=vmem, size = 0x8000, scoped, tag = 'input window, operand 1, single buffered']
    #allocation6 [shape = 's32[1]{0}', space=sflag, size = 0x4, scoped, tag = 'scoped memory for tpu_custom_call.1']
    #allocation7 [shape = 'u8[65536]{0}', space=vmem, size = 0x10000, scoped, tag = 'output window, operand 0']
    #allocation8 [shape = 'u8[2048]{0}', space=vmem, size = 0x800, scoped, tag = 'output window, operand 1']
    #allocation9 [shape = 's32[2]{0}', space=sflag, size = 0x8, scoped, tag = 'scoped memory for tpu_custom_call.1']
    %10 = vsyncpa [#allocation3], 0
    %s11 = scalar_lea.sflag [#allocation3], 1
    %12 = vsyncpa %s11, 0
    %13 = vsyncpa [#allocation6], 0
    %14 = vsyncpa [#allocation4], 0
    %s15 = scalar_lea.sflag [#allocation4], 1
    %16 = vsyncpa %s15, 0
    %17 = vsyncpa [#allocation9], 0
    %s18 = scalar_lea.sflag [#allocation9], 1
    %19 = vsyncpa %s18, 0
    loop: start=0, step=1, limit=4
    $region2: #{tpu_custom_call.1} parent=1 // loop_pre_header
      _
    $region3: #{tpu_custom_call.1} parent=1 // loop_header
      %s21 = sphi 0, %s25
      %p22 = scmp.ge.s32.totalorder %s21, 4
      %s31 = sphi 0, %s33
      %s34 = sphi 0, %s31
      %s35 = sphi 0, %s34
      %s51 = sphi 0, %s35
      %s55 = sphi 0, %s55
      %s57 = sphi 0, %s55
      %s58 = sphi 0, %s57
      %s72 = sphi 0, %s58
      %s76 = sphi 0, %s76
      %s78 = sphi 0, %s76
      %s79 = sphi 0, %s78
      %s93 = sphi 0, %s79
      %s99 = sphi 0, %s101
      %s102 = sphi 0, %s99
      %s103 = sphi 0, %s102
      %s119 = sphi 0, %s103
      %s125 = sphi 0, %s127
      %s128 = sphi 0, %s125
      %s129 = sphi 0, %s128
      %s145 = sphi 0, %s129
    $region4: #{tpu_custom_call.1} parent=1 // loop_header_branch
      %24 = sbr.rel (%p22) target = $region8
    $region5: #{tpu_custom_call.1} parent=1 // loop_body
      %s26 = ssub.s32 %s21, 1
      %s27 = ssub.s32 %s21, 2
      %s28 = sadd.s32 %s21, 1
      %s29 = ssub.s32 %s21, %s28
      %p30 = scmp.eq.s32.totalorder %s29, 0
      %s32 = sadd.s32 %s31, 1
      %s33 = scalar_select %p30, %s31, %s32
      %p36 = pneg %p30
      %p37 = scmp.eq.s32.totalorder %s21, 1
      %p38 = por %p36, %p37
      %p39 = scmp.ne.s32.totalorder %s31, %s34
      %p40 = scmp.eq.s32.totalorder %s21, 0
      %p41 = por %p39, %p40
      %p42 = scmp.ne.s32.totalorder %s31, %s34
      %p43 = scmp.eq.s32.totalorder %s26, 1
      %p44 = por %p42, %p43
      %p45 = scmp.ne.s32.totalorder %s34, %s35
      %p46 = scmp.eq.s32.totalorder %s26, 0
      %p47 = por %p45, %p46
      %p48 = scmp.ne.s32.totalorder %s34, %s35
      %p49 = scmp.eq.s32.totalorder %s27, 1
      %p50 = por %p48, %p49
      %p52 = scmp.ne.s32.totalorder %s35, %s51
      %p53 = scmp.eq.s32.totalorder %s27, 0
      %p54 = por %p52, %p53
      %s56 = sadd.s32 %s55, 1
      %p59 = scmp.eq.s32.totalorder %s21, 1
      %p60 = scmp.ne.s32.totalorder %s55, %s57
      %p61 = scmp.eq.s32.totalorder %s21, 0
      %p62 = por %p60, %p61
      %p63 = scmp.ne.s32.totalorder %s55, %s57
      %p64 = scmp.eq.s32.totalorder %s26, 1
      %p65 = por %p63, %p64
      %p66 = scmp.ne.s32.totalorder %s57, %s58
      %p67 = scmp.eq.s32.totalorder %s26, 0
      %p68 = por %p66, %p67
      %p69 = scmp.ne.s32.totalorder %s57, %s58
      %p70 = scmp.eq.s32.totalorder %s27, 1
      %p71 = por %p69, %p70
      %p73 = scmp.ne.s32.totalorder %s58, %s72
      %p74 = scmp.eq.s32.totalorder %s27, 0
      %p75 = por %p73, %p74
      %s77 = sadd.s32 %s76, 1
      %p80 = scmp.eq.s32.totalorder %s21, 1
      %p81 = scmp.ne.s32.totalorder %s76, %s78
      %p82 = scmp.eq.s32.totalorder %s21, 0
      %p83 = por %p81, %p82
      %p84 = scmp.ne.s32.totalorder %s76, %s78
      %p85 = scmp.eq.s32.totalorder %s26, 1
      %p86 = por %p84, %p85
      %p87 = scmp.ne.s32.totalorder %s78, %s79
      %p88 = scmp.eq.s32.totalorder %s26, 0
      %p89 = por %p87, %p88
      %p90 = scmp.ne.s32.totalorder %s78, %s79
      %p91 = scmp.eq.s32.totalorder %s27, 1
      %p92 = por %p90, %p91
      %p94 = scmp.ne.s32.totalorder %s79, %s93
      %p95 = scmp.eq.s32.totalorder %s27, 0
      %p96 = por %p94, %p95
      %s97 = ssub.s32 %s21, %s28
      %p98 = scmp.eq.s32.totalorder %s97, 0
      %s100 = sadd.s32 %s99, 1
      %s101 = scalar_select %p98, %s99, %s100
      %p104 = pneg %p98
      %p105 = scmp.eq.s32.totalorder %s21, 1
      %p106 = por %p104, %p105
      %p107 = scmp.ne.s32.totalorder %s99, %s102
      %p108 = scmp.eq.s32.totalorder %s21, 0
      %p109 = por %p107, %p108
      %p110 = scmp.ne.s32.totalorder %s99, %s102
      %p111 = scmp.eq.s32.totalorder %s26, 1
      %p112 = por %p110, %p111
      %p113 = scmp.ne.s32.totalorder %s102, %s103
      %p114 = scmp.eq.s32.totalorder %s26, 0
      %p115 = por %p113, %p114
      %p116 = scmp.ne.s32.totalorder %s102, %s103
      %p117 = scmp.eq.s32.totalorder %s27, 1
      %p118 = por %p116, %p117
      %p120 = scmp.ne.s32.totalorder %s103, %s119
      %p121 = scmp.eq.s32.totalorder %s27, 0
      %p122 = por %p120, %p121
      %s123 = ssub.s32 %s21, %s28
      %p124 = scmp.eq.s32.totalorder %s123, 0
      %s126 = sadd.s32 %s125, 1
      %s127 = scalar_select %p124, %s125, %s126
      %p130 = pneg %p124
      %p131 = scmp.eq.s32.totalorder %s21, 1
      %p132 = por %p130, %p131
      %p133 = scmp.ne.s32.totalorder %s125, %s128
      %p134 = scmp.eq.s32.totalorder %s21, 0
      %p135 = por %p133, %p134
      %p136 = scmp.ne.s32.totalorder %s125, %s128
      %p137 = scmp.eq.s32.totalorder %s26, 1
      %p138 = por %p136, %p137
      %p139 = scmp.ne.s32.totalorder %s128, %s129
      %p140 = scmp.eq.s32.totalorder %s26, 0
      %p141 = por %p139, %p140
      %p142 = scmp.ne.s32.totalorder %s128, %s129
      %p143 = scmp.eq.s32.totalorder %s27, 1
      %p144 = por %p142, %p143
      %p146 = scmp.ne.s32.totalorder %s129, %s145
      %p147 = scmp.eq.s32.totalorder %s27, 0
      %p148 = por %p146, %p147
      %p149 = scmp.le.s32.totalorder 1, %s21
      %p150 = scmp.lt.s32.totalorder %s21, 3
      %p151 = pnand %p149, %p150
      %p152 = pneg %p151
      // Predicated region
      $region9: #{tpu_custom_call.1} parent=5 // pred_check
        _
      $region10: #{tpu_custom_call.1} parent=5 // pred_check_branch
        %154 = sbr.rel (%p151) target = $region12
      $region11: #{tpu_custom_call.1} parent=5 // pred_region
        %s155 = ssub.s32 %s21, 1
        // Predicated region
        $region13: #{tpu_custom_call.1} parent=11 // pred_check
          %p156 = pneg %p68
        $region14: #{tpu_custom_call.1} parent=11 // pred_check_branch
          %158 = sbr.rel (%p156) target = $region16
        $region15: #{tpu_custom_call.1} parent=11 // pred_region
          %160 = vsyncadd [#allocation6], 0
          %s161 = sshll.u32 %s1, 4
          %s162 = int_to_ptr.hbm [resolvable:$true] %s161
          %s163 = sshll.u32 [#allocation5], 4
          %s164 = int_to_ptr.vmem [resolvable:$true] %s163
          %169 = dma.hbm_to_vmem [thread:$0]  %s162, 1024, %s164, [#allocation6], 64, 64, 4
        $region16: #{tpu_custom_call.1} parent=11 // pred_fallthru
          _
        // Predicated region
        $region17: #{tpu_custom_call.1} parent=11 // pred_check
          %p170 = pneg %p89
        $region18: #{tpu_custom_call.1} parent=11 // pred_check_branch
          %172 = sbr.rel (%p170) target = $region20
        $region19: #{tpu_custom_call.1} parent=11 // pred_region
          _
        $region20: #{tpu_custom_call.1} parent=11 // pred_fallthru
          _
      $region12: #{tpu_custom_call.1} parent=5 // pred_fallthru
        _
      %p173 = scmp.lt.s32.totalorder %s21, 2
      // Predicated region
      $region21: #{tpu_custom_call.1} parent=5 // pred_check
        %p174 = pneg %p173
      $region22: #{tpu_custom_call.1} parent=5 // pred_check_branch
        %176 = sbr.rel (%p174) target = $region24
      $region23: #{tpu_custom_call.1} parent=5 // pred_region
        // Predicated region
        $region25: #{tpu_custom_call.1} parent=23 // pred_check
          %p177 = pneg %p41
        $region26: #{tpu_custom_call.1} parent=23 // pred_check_branch
          %179 = sbr.rel (%p177) target = $region28
        $region27: #{tpu_custom_call.1} parent=23 // pred_region
          #allocation11 [shape = 'u32[6]{0}', space=smem, size = 0x18, scoped, tag = 'DMA stride descriptor']
          %s180 = sand.u32 %s31, 1
          %s181 = scalar_lea.sflag [#allocation3], %s180
          %s182 = sand.u32 %s31, 1
          %s183 = smul.addr %s182, 96
          %s184 = scalar_lea.vmem [#allocation2], %s183
          %s185 = smul.u32 8, %s21
          %187 = vsyncadd %s181, 0
          %s188 = smul.addr %s185, 4
          %s189 = scalar_lea.hbm %s0, %s188
          %s191 = sshll.u32 1, 14
          %s192 = sxor.u32 4294967295, %s191
          %s194 = sld [smem:[#allocation0]]
          %s195 = sadd.s32 2, %s194
          %s197 = sshll.u32 7, 26
          %s198 = sxor.u32 4294967295, %s197
          %s199 = sand.u32 0, %s198
          %s200 = sshll.u32 %s195, 26
          %s201 = sor.u32 %s199, %s200
          %s202 = sshll.u32 %s189, 4
          %s203 = int_to_ptr.hbm [resolvable:$true] %s202
          %s204 = sshll.u32 %s184, 4
          %s205 = int_to_ptr.vmem [resolvable:$true] %s204
          %211 = sst [smem:[#allocation11]] 1024
          %s212 = scalar_lea.smem [#allocation11], 1
          %213 = sst [smem:[%s212]] 512
          %s214 = scalar_lea.smem [#allocation11], 2
          %215 = sst [smem:[%s214]] 8
          %s216 = scalar_lea.smem [#allocation11], 3
          %217 = sst [smem:[%s216]] 64
          %s218 = scalar_lea.smem [#allocation11], 4
          %219 = sst [smem:[%s218]] 64
          %s220 = scalar_lea.smem [#allocation11], 5
          %221 = sst [smem:[%s220]] 4
          %223 = dma.general %s203, 1536, %s205, %s181, [#allocation10], [#allocation11], %s201, 0
        $region28: #{tpu_custom_call.1} parent=23 // pred_fallthru
          _
      $region24: #{tpu_custom_call.1} parent=5 // pred_fallthru
        _
      %p224 = scmp.le.s32.totalorder 1, %s21
      %p225 = scmp.lt.s32.totalorder %s21, 3
      %p226 = pnand %p224, %p225
      %p227 = pneg %p226
      // Predicated region
      $region29: #{tpu_custom_call.1} parent=5 // pred_check
        _
      $region30: #{tpu_custom_call.1} parent=5 // pred_check_branch
        %229 = sbr.rel (%p226) target = $region32
      $region31: #{tpu_custom_call.1} parent=5 // pred_region
        %s230 = ssub.s32 %s21, 1
        %s231 = sand.u32 %s34, 1
        %s232 = scalar_lea.sflag [#allocation3], %s231
        %s233 = sand.u32 %s34, 1
        %s234 = smul.addr %s233, 96
        %s235 = scalar_lea.vmem [#allocation2], %s234
        // Predicated region
        $region33: #{tpu_custom_call.1} parent=31 // pred_check
          %p236 = pneg %p47
        $region34: #{tpu_custom_call.1} parent=31 // pred_check_branch
          %238 = sbr.rel (%p236) target = $region36
        $region35: #{tpu_custom_call.1} parent=31 // pred_region
          %240 = dma.done %s232, 1536
        $region36: #{tpu_custom_call.1} parent=31 // pred_fallthru
          _
        // Predicated region
        $region37: #{tpu_custom_call.1} parent=31 // pred_check
          %p241 = pneg %p68
        $region38: #{tpu_custom_call.1} parent=31 // pred_check_branch
          %243 = sbr.rel (%p241) target = $region40
        $region39: #{tpu_custom_call.1} parent=31 // pred_region
          %245 = dma.done [#allocation6], 1024
        $region40: #{tpu_custom_call.1} parent=31 // pred_fallthru
          _
        %s246 = sand.u32 %s34, 1
        %s247 = scalar_lea.sflag [#allocation3], %s246
        %s248 = sand.u32 %s34, 1
        %s249 = smul.addr %s248, 96
        %s250 = scalar_lea.vmem [#allocation2], %s249
        %p251 = pneg %p47
        %p252 = pneg %p44
        %p253 = pneg %p68
        %p254 = pneg %p65
        %p255 = pneg %p89
        %p256 = pneg %p86
        %p257 = pneg %p115
        %p258 = pneg %p112
        %s259 = sand.u32 %s102, 1
        %s260 = scalar_lea.sflag [#allocation4], %s259
        %s261 = sand.u32 %s102, 1
        %s262 = smul.addr %s261, 64
        %s263 = scalar_lea.vmem [#allocation7], %s262
        %p264 = pneg %p141
        %p265 = pneg %p138
        %s266 = sand.u32 %s128, 1
        %s267 = scalar_lea.sflag [#allocation9], %s266
        %s268 = sand.u32 %s128, 1
        %s269 = smul.addr %s268, 2
        %s270 = scalar_lea.vmem [#allocation8], %s269
        %s271 = smul.u32 8, %s26
        %s272 = smul.u32 8, %s26
        %v273 = vld [vmem:[#allocation5] sm:$0xf]
        %v274 = vld [vmem:[#allocation5 + $0x4] sm:$0xf]
        %v275 = vld [vmem:[#allocation5 + $0x8] sm:$0xf]
        %v276 = vld [vmem:[#allocation5 + $0xc] sm:$0xf]
        %v277 = vld [vmem:[#allocation5 + $0x10] sm:$0xf]
        %v278 = vld [vmem:[#allocation5 + $0x14] sm:$0xf]
        %v279 = vld [vmem:[#allocation5 + $0x18] sm:$0xf]
        %v280 = vld [vmem:[#allocation5 + $0x1c] sm:$0xf]
        %v281 = vld [vmem:[#allocation5 + $0x20] sm:$0xf]
        %v282 = vld [vmem:[#allocation5 + $0x24] sm:$0xf]
        %v283 = vld [vmem:[#allocation5 + $0x28] sm:$0xf]
        %v284 = vld [vmem:[#allocation5 + $0x2c] sm:$0xf]
        %v285 = vld [vmem:[#allocation5 + $0x30] sm:$0xf]
        %v286 = vld [vmem:[#allocation5 + $0x34] sm:$0xf]
        %v287 = vld [vmem:[#allocation5 + $0x38] sm:$0xf]
        %v288 = vld [vmem:[#allocation5 + $0x3c] sm:$0xf]
        %v289 = vld [vmem:[%s235] sm:$0xf]
        %v290 = vld [vmem:[%s235 + $0x4] sm:$0xf]
        %v291 = vld [vmem:[%s235 + $0x8] sm:$0xf]
        %v292 = vld [vmem:[%s235 + $0xc] sm:$0xf]
        %v293 = vld [vmem:[%s235 + $0x10] sm:$0xf]
        %v294 = vld [vmem:[%s235 + $0x14] sm:$0xf]
        %v295 = vld [vmem:[%s235 + $0x18] sm:$0xf]
        %v296 = vld [vmem:[%s235 + $0x1c] sm:$0xf]
        %v305 = vunpack.c.l.b16 %v289
        %v306 = vunpack.c.l.b16 %v290
        %v307 = vunpack.c.l.b16 %v291
        %v308 = vunpack.c.l.b16 %v292
        %v309 = vunpack.c.l.b16 %v293
        %v310 = vunpack.c.l.b16 %v294
        %v311 = vunpack.c.l.b16 %v295
        %v312 = vunpack.c.l.b16 %v296
        %v313 = vpack.c.b16 %v306, %v305
        %v314 = vpack.c.b16 %v308, %v307
        %v315 = vpack.c.b16 %v310, %v309
        %v316 = vpack.c.b16 %v312, %v311
        %v337 = vunpack.c.l.b16 %v273
        %v338 = vunpack.c.l.b16 %v274
        %v339 = vunpack.c.l.b16 %v275
        %v340 = vunpack.c.l.b16 %v276
        %v341 = vunpack.c.l.b16 %v277
        %v342 = vunpack.c.l.b16 %v278
        %v343 = vunpack.c.l.b16 %v279
        %v344 = vunpack.c.l.b16 %v280
        %v345 = vunpack.c.l.b16 %v281
        %v346 = vunpack.c.l.b16 %v282
        %v347 = vunpack.c.l.b16 %v283
        %v348 = vunpack.c.l.b16 %v284
        %v349 = vunpack.c.l.b16 %v285
        %v350 = vunpack.c.l.b16 %v286
        %v351 = vunpack.c.l.b16 %v287
        %v352 = vunpack.c.l.b16 %v288
        %v353 = vpack.c.b16 %v338, %v337
        %v354 = vpack.c.b16 %v340, %v339
        %v355 = vpack.c.b16 %v342, %v341
        %v356 = vpack.c.b16 %v344, %v343
        %v357 = vpack.c.b16 %v346, %v345
        %v358 = vpack.c.b16 %v348, %v347
        %v359 = vpack.c.b16 %v350, %v349
        %v360 = vpack.c.b16 %v352, %v351
        %369 = vmatpush.bf16.msra.mxu0 %v360
        %370 = vmatpush.bf16.msra.mxu0 %v359
        %371 = vmatpush.bf16.msra.mxu0 %v358
        %372 = vmatpush.bf16.msra.mxu0 %v357
        %373 = vmatpush.bf16.msra.mxu0 %v356
        %374 = vmatpush.bf16.msra.mxu0 %v355
        %375 = vmatpush.bf16.msra.mxu0 %v354
        %376 = vmatpush.bf16.msra.mxu0 %v353
        %377 = vmatmul.bf16.gmra.mxu0 %v313
        %v378 = vpop.f32.mrf.mxu0
        %v379 = vadd.f32 0.0, %v378
        %v380 = vpop.f32.mrf.mxu0
        %v381 = vadd.f32 0.0, %v380
        %382 = vmatmul.bf16.gmra.mxu0 %v314
        %v383 = vpop.f32.mrf.mxu0
        %v384 = vadd.f32 0.0, %v383
        %v385 = vpop.f32.mrf.mxu0
        %v386 = vadd.f32 0.0, %v385
        %387 = vmatmul.bf16.gmra.mxu0 %v315
        %v388 = vpop.f32.mrf.mxu0
        %v389 = vadd.f32 0.0, %v388
        %v390 = vpop.f32.mrf.mxu0
        %v391 = vadd.f32 0.0, %v390
        %392 = vmatmul.bf16.gmra.mxu0 %v316
        %v393 = vpop.f32.mrf.mxu0
        %v394 = vadd.f32 0.0, %v393
        %v395 = vpop.f32.mrf.mxu0
        %v396 = vadd.f32 0.0, %v395
        %397 = vdwg.mxu0
        %s398 = scalar_lea.vmem %s235, 32 [#allocation2]
        %v399 = vld [vmem:[%s398] sm:$0xf]
        %v400 = vld [vmem:[%s398 + $0x4] sm:$0xf]
        %v401 = vld [vmem:[%s398 + $0x8] sm:$0xf]
        %v402 = vld [vmem:[%s398 + $0xc] sm:$0xf]
        %v403 = vld [vmem:[%s398 + $0x10] sm:$0xf]
        %v404 = vld [vmem:[%s398 + $0x14] sm:$0xf]
        %v405 = vld [vmem:[%s398 + $0x18] sm:$0xf]
        %v406 = vld [vmem:[%s398 + $0x1c] sm:$0xf]
        %v415 = vunpack.c.l.b16 %v399
        %v416 = vunpack.c.l.b16 %v400
        %v417 = vunpack.c.l.b16 %v401
        %v418 = vunpack.c.l.b16 %v402
        %v419 = vunpack.c.l.b16 %v403
        %v420 = vunpack.c.l.b16 %v404
        %v421 = vunpack.c.l.b16 %v405
        %v422 = vunpack.c.l.b16 %v406
        %v423 = vpack.c.b16 %v416, %v415
        %v424 = vpack.c.b16 %v418, %v417
        %v425 = vpack.c.b16 %v420, %v419
        %v426 = vpack.c.b16 %v422, %v421
        %431 = vmatpush.bf16.msra.mxu0 %v360
        %432 = vmatpush.bf16.msra.mxu0 %v359
        %433 = vmatpush.bf16.msra.mxu0 %v358
        %434 = vmatpush.bf16.msra.mxu0 %v357
        %435 = vmatpush.bf16.msra.mxu0 %v356
        %436 = vmatpush.bf16.msra.mxu0 %v355
        %437 = vmatpush.bf16.msra.mxu0 %v354
        %438 = vmatpush.bf16.msra.mxu0 %v353
        %439 = vmatmul.bf16.gmra.mxu0 %v423
        %v440 = vpop.f32.mrf.mxu0
        %v441 = vadd.f32 0.0, %v440
        %v442 = vpop.f32.mrf.mxu0
        %v443 = vadd.f32 0.0, %v442
        %444 = vmatmul.bf16.gmra.mxu0 %v424
        %v445 = vpop.f32.mrf.mxu0
        %v446 = vadd.f32 0.0, %v445
        %v447 = vpop.f32.mrf.mxu0
        %v448 = vadd.f32 0.0, %v447
        %449 = vmatmul.bf16.gmra.mxu0 %v425
        %v450 = vpop.f32.mrf.mxu0
        %v451 = vadd.f32 0.0, %v450
        %v452 = vpop.f32.mrf.mxu0
        %v453 = vadd.f32 0.0, %v452
        %454 = vmatmul.bf16.gmra.mxu0 %v426
        %v455 = vpop.f32.mrf.mxu0
        %v456 = vadd.f32 0.0, %v455
        %v457 = vpop.f32.mrf.mxu0
        %v458 = vadd.f32 0.0, %v457
        %459 = vdwg.mxu0
        %v460 = vmax.f32 %v379, %v441
        %v461 = vmax.f32 %v381, %v443
        %v462 = vmax.f32 %v384, %v446
        %v463 = vmax.f32 %v386, %v448
        %v464 = vmax.f32 %v389, %v451
        %v465 = vmax.f32 %v391, %v453
        %v466 = vmax.f32 %v394, %v456
        %v467 = vmax.f32 %v396, %v458
        %s468 = scalar_lea.vmem %s235, 64 [#allocation2]
        %v469 = vld [vmem:[%s468] sm:$0xf]
        %v470 = vld [vmem:[%s468 + $0x4] sm:$0xf]
        %v471 = vld [vmem:[%s468 + $0x8] sm:$0xf]
        %v472 = vld [vmem:[%s468 + $0xc] sm:$0xf]
        %v473 = vld [vmem:[%s468 + $0x10] sm:$0xf]
        %v474 = vld [vmem:[%s468 + $0x14] sm:$0xf]
        %v475 = vld [vmem:[%s468 + $0x18] sm:$0xf]
        %v476 = vld [vmem:[%s468 + $0x1c] sm:$0xf]
        %v485 = vunpack.c.l.b16 %v469
        %v486 = vunpack.c.l.b16 %v470
        %v487 = vunpack.c.l.b16 %v471
        %v488 = vunpack.c.l.b16 %v472
        %v489 = vunpack.c.l.b16 %v473
        %v490 = vunpack.c.l.b16 %v474
        %v491 = vunpack.c.l.b16 %v475
        %v492 = vunpack.c.l.b16 %v476
        %v493 = vpack.c.b16 %v486, %v485
        %v494 = vpack.c.b16 %v488, %v487
        %v495 = vpack.c.b16 %v490, %v489
        %v496 = vpack.c.b16 %v492, %v491
        %501 = vmatpush.bf16.msra.mxu0 %v360
        %502 = vmatpush.bf16.msra.mxu0 %v359
        %503 = vmatpush.bf16.msra.mxu0 %v358
        %504 = vmatpush.bf16.msra.mxu0 %v357
        %505 = vmatpush.bf16.msra.mxu0 %v356
        %506 = vmatpush.bf16.msra.mxu0 %v355
        %507 = vmatpush.bf16.msra.mxu0 %v354
        %508 = vmatpush.bf16.msra.mxu0 %v353
        %509 = vmatmul.bf16.gmra.mxu0 %v493
        %v510 = vpop.f32.mrf.mxu0
        %v511 = vadd.f32 0.0, %v510
        %v512 = vpop.f32.mrf.mxu0
        %v513 = vadd.f32 0.0, %v512
        %514 = vmatmul.bf16.gmra.mxu0 %v494
        %v515 = vpop.f32.mrf.mxu0
        %v516 = vadd.f32 0.0, %v515
        %v517 = vpop.f32.mrf.mxu0
        %v518 = vadd.f32 0.0, %v517
        %519 = vmatmul.bf16.gmra.mxu0 %v495
        %v520 = vpop.f32.mrf.mxu0
        %v521 = vadd.f32 0.0, %v520
        %v522 = vpop.f32.mrf.mxu0
        %v523 = vadd.f32 0.0, %v522
        %524 = vmatmul.bf16.gmra.mxu0 %v496
        %v525 = vpop.f32.mrf.mxu0
        %v526 = vadd.f32 0.0, %v525
        %v527 = vpop.f32.mrf.mxu0
        %v528 = vadd.f32 0.0, %v527
        %529 = vdwg.mxu0
        %v530 = vmax.f32 %v460, %v511
        %v531 = vmax.f32 %v461, %v513
        %v532 = vmax.f32 %v462, %v516
        %v533 = vmax.f32 %v463, %v518
        %v534 = vmax.f32 %v464, %v521
        %v535 = vmax.f32 %v465, %v523
        %v536 = vmax.f32 %v466, %v526
        %v537 = vmax.f32 %v467, %v528
        %v538 = vld [vmem:[%s2] sm:$0x1]
        %v540 = vperm.slane %v538, 0
        %v542 = vadd.f32 %v530, %v540
        %v543 = vadd.f32 %v531, %v540
        %v544 = vadd.f32 %v532, %v540
        %v545 = vadd.f32 %v533, %v540
        %v546 = vadd.f32 %v534, %v540
        %v547 = vadd.f32 %v535, %v540
        %v548 = vadd.f32 %v536, %v540
        %v549 = vadd.f32 %v537, %v540
        %vm550 = vcmp.gt.f32.partialorder %v542, 0.0
        %vm551 = vcmp.gt.f32.partialorder %v543, 0.0
        %vm552 = vcmp.gt.f32.partialorder %v544, 0.0
        %vm553 = vcmp.gt.f32.partialorder %v545, 0.0
        %vm554 = vcmp.gt.f32.partialorder %v546, 0.0
        %vm555 = vcmp.gt.f32.partialorder %v547, 0.0
        %vm556 = vcmp.gt.f32.partialorder %v548, 0.0
        %vm557 = vcmp.gt.f32.partialorder %v549, 0.0
        %v558 = vmin.f32 %v542, 0.0
        %v559 = vmin.f32 %v543, 0.0
        %v560 = vmin.f32 %v544, 0.0
        %v561 = vmin.f32 %v545, 0.0
        %v562 = vmin.f32 %v546, 0.0
        %v563 = vmin.f32 %v547, 0.0
        %v564 = vmin.f32 %v548, 0.0
        %v565 = vmin.f32 %v549, 0.0
        %v566 = vmul.f32 %v558, 1.442695
        %v567 = vpow.pop %v566
        %v568 = vmul.f32 %v559, 1.442695
        %v569 = vpow.pop %v568
        %v570 = vmul.f32 %v560, 1.442695
        %v571 = vpow.pop %v570
        %v572 = vmul.f32 %v561, 1.442695
        %v573 = vpow.pop %v572
        %v574 = vmul.f32 %v562, 1.442695
        %v575 = vpow.pop %v574
        %v576 = vmul.f32 %v563, 1.442695
        %v577 = vpow.pop %v576
        %v578 = vmul.f32 %v564, 1.442695
        %v579 = vpow.pop %v578
        %v580 = vmul.f32 %v565, 1.442695
        %v581 = vpow.pop %v580
        %v582 = vsub.f32 %v567, 1.0
        %v583 = vsub.f32 %v569, 1.0
        %v584 = vsub.f32 %v571, 1.0
        %v585 = vsub.f32 %v573, 1.0
        %v586 = vsub.f32 %v575, 1.0
        %v587 = vsub.f32 %v577, 1.0
        %v588 = vsub.f32 %v579, 1.0
        %v589 = vsub.f32 %v581, 1.0
        %v590 = vsel %vm550, %v542, %v582
        %v591 = vsel %vm551, %v543, %v583
        %v592 = vsel %vm552, %v544, %v584
        %v593 = vsel %vm553, %v545, %v585
        %v594 = vsel %vm554, %v546, %v586
        %v595 = vsel %vm555, %v547, %v587
        %v596 = vsel %vm556, %v548, %v588
        %v597 = vsel %vm557, %v549, %v589
        %598 = vst [vmem:[%s263] sm:$0xff] %v590
        %599 = vst [vmem:[%s263 + $0x8] sm:$0xff] %v591
        %600 = vst [vmem:[%s263 + $0x10] sm:$0xff] %v592
        %601 = vst [vmem:[%s263 + $0x18] sm:$0xff] %v593
        %602 = vst [vmem:[%s263 + $0x20] sm:$0xff] %v594
        %603 = vst [vmem:[%s263 + $0x28] sm:$0xff] %v595
        %604 = vst [vmem:[%s263 + $0x30] sm:$0xff] %v596
        %605 = vst [vmem:[%s263 + $0x38] sm:$0xff] %v597
        %s606 = smul.u32 %s26, 64
        %v607 = vlaneseq
        %v608 = vshrl.u32 %v607, 7
        %v609 = vadd.s32 %v608, 8
        %v610 = vadd.s32 %v608, 16
        %v611 = vadd.s32 %v608, 24
        %v612 = vadd.s32 %v608, 32
        %v613 = vadd.s32 %v608, 40
        %v614 = vadd.s32 %v608, 48
        %v615 = vadd.s32 %v608, 56
        %v616 = vstv %s606
        %v617 = vadd.s32 %v616, %v608
        %v618 = vadd.s32 %v616, %v609
        %v619 = vadd.s32 %v616, %v610
        %v620 = vadd.s32 %v616, %v611
        %v621 = vadd.s32 %v616, %v612
        %v622 = vadd.s32 %v616, %v613
        %v623 = vadd.s32 %v616, %v614
        %v624 = vadd.s32 %v616, %v615
        %vm625 = vcmp.lt.s32.totalorder %v617, 112
        %vm626 = vcmp.lt.s32.totalorder %v618, 112
        %vm627 = vcmp.lt.s32.totalorder %v619, 112
        %vm628 = vcmp.lt.s32.totalorder %v620, 112
        %vm629 = vcmp.lt.s32.totalorder %v621, 112
        %vm630 = vcmp.lt.s32.totalorder %v622, 112
        %vm631 = vcmp.lt.s32.totalorder %v623, 112
        %vm632 = vcmp.lt.s32.totalorder %v624, 112
        %v633 = vsel %vm625, 1, 0
        %v634 = vsel %vm626, 1, 0
        %v635 = vsel %vm627, 1, 0
        %v636 = vsel %vm628, 1, 0
        %v637 = vsel %vm629, 1, 0
        %v638 = vsel %vm630, 1, 0
        %v639 = vsel %vm631, 1, 0
        %v640 = vsel %vm632, 1, 0
        %v641 = vcvt.s32.f32 %v633
        %v642 = vcvt.s32.f32 %v634
        %v643 = vcvt.s32.f32 %v635
        %v644 = vcvt.s32.f32 %v636
        %v645 = vcvt.s32.f32 %v637
        %v646 = vcvt.s32.f32 %v638
        %v647 = vcvt.s32.f32 %v639
        %v648 = vcvt.s32.f32 %v640
        %v649 = vmul.f32 %v590, %v641
        %v650 = vmul.f32 %v591, %v642
        %v651 = vmul.f32 %v592, %v643
        %v652 = vmul.f32 %v593, %v644
        %v653 = vmul.f32 %v594, %v645
        %v654 = vmul.f32 %v595, %v646
        %v655 = vmul.f32 %v596, %v647
        %v656 = vmul.f32 %v597, %v648
        %v657 = vadd.f32 %v649, %v650
        %v658 = vadd.f32 %v657, %v651
        %v659 = vadd.f32 %v658, %v652
        %v660 = vadd.f32 %v659, %v653
        %v661 = vadd.f32 %v660, %v654
        %v662 = vadd.f32 %v661, %v655
        %v663 = vadd.f32 %v662, %v656
        %v664 = vrot.slane %v663, 4
        %v665 = vadd.f32 %v663, %v664
        %v666 = vrot.slane %v665, 2
        %v667 = vadd.f32 %v665, %v666
        %v668 = vrot.slane %v667, 1
        %v669 = vadd.f32 %v667, %v668
        %v670 = vmul.f32 %v649, %v649
        %v671 = vmul.f32 %v650, %v650
        %v672 = vmul.f32 %v651, %v651
        %v673 = vmul.f32 %v652, %v652
        %v674 = vmul.f32 %v653, %v653
        %v675 = vmul.f32 %v654, %v654
        %v676 = vmul.f32 %v655, %v655
        %v677 = vmul.f32 %v656, %v656
        %v678 = vadd.f32 %v670, %v671
        %v679 = vadd.f32 %v678, %v672
        %v680 = vadd.f32 %v679, %v673
        %v681 = vadd.f32 %v680, %v674
        %v682 = vadd.f32 %v681, %v675
        %v683 = vadd.f32 %v682, %v676
        %v684 = vadd.f32 %v683, %v677
        %v685 = vrot.slane %v684, 4
        %v686 = vadd.f32 %v684, %v685
        %v687 = vrot.slane %v686, 2
        %v688 = vadd.f32 %v686, %v687
        %v689 = vrot.slane %v688, 1
        %v690 = vadd.f32 %v688, %v689
        %vm691 = vcmask 1040384
        %v692 = vsel %vm691, %v669, %v690
        %693 = vst [vmem:[%s270] sm:$0x3] %v692
        %s694 = sand.u32 %s102, 1
        %s695 = scalar_lea.sflag [#allocation4], %s694
        %s696 = sand.u32 %s102, 1
        %s697 = smul.addr %s696, 64
        %s698 = scalar_lea.vmem [#allocation7], %s697
        %s699 = sand.u32 %s128, 1
        %s700 = scalar_lea.sflag [#allocation9], %s699
        %s701 = sand.u32 %s128, 1
        %s702 = smul.addr %s701, 2
        %s703 = scalar_lea.vmem [#allocation8], %s702
        // Predicated region
        $region41: #{tpu_custom_call.1} parent=31 // pred_check
          %p704 = pneg %p112
        $region42: #{tpu_custom_call.1} parent=31 // pred_check_branch
          %706 = sbr.rel (%p704) target = $region44
        $region43: #{tpu_custom_call.1} parent=31 // pred_region
          %s707 = smul.u32 8, %s26
          %709 = vsyncadd %s695, 0
          %s710 = smul.addr %s707, 8
          %s711 = scalar_lea.hbm %s3, %s710
          %s712 = sshll.u32 %s698, 4
          %s713 = int_to_ptr.vmem [resolvable:$true] %s712
          %s714 = sshll.u32 %s711, 4
          %s715 = int_to_ptr.hbm [resolvable:$true] %s714
          %720 = dma.vmem_to_hbm [thread:$0]  %s713, 1024, %s715, %s695, 128, 128, 8
        $region44: #{tpu_custom_call.1} parent=31 // pred_fallthru
          _
        // Predicated region
        $region45: #{tpu_custom_call.1} parent=31 // pred_check
          %p721 = pneg %p138
        $region46: #{tpu_custom_call.1} parent=31 // pred_check_branch
          %723 = sbr.rel (%p721) target = $region48
        $region47: #{tpu_custom_call.1} parent=31 // pred_region
          %725 = vsyncadd %s700, 0
          %s726 = smul.addr %s26, 2
          %s727 = scalar_lea.hbm %s4, %s726
          %s729 = sshll.u32 %s703, 4
          %s730 = int_to_ptr.vmem [resolvable:$true] %s729
          %s731 = sshll.u32 %s727, 4
          %s732 = int_to_ptr.hbm [resolvable:$true] %s731
          %734 = dma.vmem_to_hbm [thread:$0]  %s730, 32, %s732, %s700
        $region48: #{tpu_custom_call.1} parent=31 // pred_fallthru
          _
      $region32: #{tpu_custom_call.1} parent=5 // pred_fallthru
        _
      %p735 = scmp.le.s32.totalorder 2, %s21
      // Predicated region
      $region49: #{tpu_custom_call.1} parent=5 // pred_check
        %p736 = pneg %p735
      $region50: #{tpu_custom_call.1} parent=5 // pred_check_branch
        %738 = sbr.rel (%p736) target = $region52
      $region51: #{tpu_custom_call.1} parent=5 // pred_region
        %s739 = ssub.s32 %s21, 2
        // Predicated region
        $region53: #{tpu_custom_call.1} parent=51 // pred_check
          %p740 = pneg %p118
        $region54: #{tpu_custom_call.1} parent=51 // pred_check_branch
          %742 = sbr.rel (%p740) target = $region56
        $region55: #{tpu_custom_call.1} parent=51 // pred_region
          %s743 = sand.u32 %s103, 1
          %s744 = scalar_lea.sflag [#allocation4], %s743
          %s745 = sand.u32 %s103, 1
          %s746 = smul.addr %s745, 64
          %s747 = scalar_lea.vmem [#allocation7], %s746
          %749 = dma.done %s744, 1024
        $region56: #{tpu_custom_call.1} parent=51 // pred_fallthru
          _
        // Predicated region
        $region57: #{tpu_custom_call.1} parent=51 // pred_check
          %p750 = pneg %p144
        $region58: #{tpu_custom_call.1} parent=51 // pred_check_branch
          %752 = sbr.rel (%p750) target = $region60
        $region59: #{tpu_custom_call.1} parent=51 // pred_region
          %s753 = sand.u32 %s129, 1
          %s754 = scalar_lea.sflag [#allocation9], %s753
          %s755 = sand.u32 %s129, 1
          %s756 = smul.addr %s755, 2
          %s757 = scalar_lea.vmem [#allocation8], %s756
          %759 = dma.done %s754, 32
        $region60: #{tpu_custom_call.1} parent=51 // pred_fallthru
          _
      $region52: #{tpu_custom_call.1} parent=5 // pred_fallthru
        _
    $region6: #{tpu_custom_call.1} parent=1 // loop_footer
      %s25 = sadd.s32 1, %s21
    $region7: #{tpu_custom_call.1} parent=1 // loop_footer_branch
      %20 = sbr.rel target = $region3
    $region8: #{tpu_custom_call.1} parent=1 // loop_exit
      _
    %760 = vsyncpa [#allocation3], 1
    %s761 = scalar_lea.sflag [#allocation3], 1
    %762 = vsyncpa %s761, 1
    %763 = vsyncpa [#allocation6], 1
    %764 = vsyncpa [#allocation4], 1
    %s765 = scalar_lea.sflag [#allocation4], 1
    %766 = vsyncpa %s765, 1
    %767 = vsyncpa [#allocation9], 1
    %s768 = scalar_lea.sflag [#allocation9], 1
    %769 = vsyncpa %s768, 1

</llo_original>
